<compile_context>
chip_gen: v7x
topology: tpu7x:2x2x1
jax: 0.10.0
libtpu: 0.0.40
codegen_flags: <defaults>
</compile_context>

<pallas_src>
import functools

import jax
import jax.numpy as jnp
from jax.experimental import pallas as pl
from jax.experimental.pallas import tpu as pltpu


def swimmer_kernel(x_ref, ts_ref, w_ref, out_ref, *, period: int):
    """One grid step processes a (J, TB) block: joints on sublanes, batch on lanes.

    x_ref   : (J, TB) VMEM  -- joint positions, joints-major layout
    ts_ref  : (1, TB) VMEM  -- timesteps
    w_ref   : (4,)    SMEM  -- [w_prop, w_osc, w_ipsi, w_contra] (unconstrained)
    out_ref : (J, TB) VMEM  -- joint torques in [-1, 1]
    """
    # Weight sign constraints: excitatory = clamp(min=0), inhibitory = clamp(max=0).
    w_prop = jnp.maximum(w_ref[0], 0.0)
    w_osc = jnp.maximum(w_ref[1], 0.0)
    w_ipsi = jnp.maximum(w_ref[2], 0.0)
    w_contra = jnp.minimum(w_ref[3], 0.0)

    J = x_ref.shape[0]

    # ---- Joints 1..J-1: proprioception only (joint i reads joint i-1). ----
    # The "shift" is just the static in-tile sublane slice rows 0..J-2; no concat,
    # no roll, no one-hot mask.  All ops below stay within one (8, 128) sublane tile.
    if J > 1:
        xm = x_ref[0 : J - 1, :]                 # (J-1, TB): joint i-1 values
        prev_d = jnp.clip(xm, 0.0, 1.0)          # dorsal split
        prev_v = -jnp.clip(xm, -1.0, 0.0)        # ventral split
        bn_d = jnp.clip(prev_d * w_prop, 0.0, 1.0)   # graded() B-neurons
        bn_v = jnp.clip(prev_v * w_prop, 0.0, 1.0)
        m_d = jnp.clip(bn_d * w_ipsi + bn_v * w_contra, 0.0, 1.0)
        m_v = jnp.clip(bn_v * w_ipsi + bn_d * w_contra, 0.0, 1.0)
        out_ref[1:J, :] = m_d - m_v

    # ---- Joint 0: head oscillator only; all math stays on the (1, TB) row. ----
    ts = ts_ref[...]                              # (1, TB)
    p = float(period)
    tsr = jnp.round(ts)
    # ts mod period without an f32 divide: precomputed reciprocal + floor, plus a cheap
    # select-based correction so it is exact even if 1/period rounds down.
    q = jnp.floor(tsr * (1.0 / p))
    phase = tsr - q * p
    phase = jnp.where(phase < 0.0, phase + p, phase)
    phase = jnp.where(phase >= p, phase - p, phase)
    osc_d = jnp.where(phase < float(period // 2), 1.0, 0.0)   # (1, TB)
    osc_v = 1.0 - osc_d

    bn0_d = jnp.clip(osc_d * w_osc, 0.0, 1.0)
    bn0_v = jnp.clip(osc_v * w_osc, 0.0, 1.0)
    m0_d = jnp.clip(bn0_d * w_ipsi + bn0_v * w_contra, 0.0, 1.0)
    m0_v = jnp.clip(bn0_v * w_ipsi + bn0_d * w_contra, 0.0, 1.0)
    out_ref[0:1, :] = m0_d - m0_v


def _round_up(x: int, m: int) -> int:
    return ((x + m - 1) // m) * m


def _pick_batch_tile(batch: int, batch_tile: int) -> int:
    """Lane-axis tile size.

    * B <= 128: single full-extent block (block dim == full array dim is legal).
    * otherwise: multiple of 128 lanes, capped by `batch_tile`, and no larger than
      round_up(ceil(B/2), 128) so there are always >= 2 grid steps -> the "parallel"
      axis can be sharded across both TensorCores on v7x.
    The last block may be ragged; Mosaic masks the output writes and the kernel body
    has no cross-lane reductions, so overhang-lane garbage is harmless.
    """
    if batch <= 128:
        return batch
    cap = max(128, (int(batch_tile) // 128) * 128)
    return min(cap, _round_up(pl.cdiv(batch, 2), 128))


def swimmer_torques(joint_pos_jm, timesteps, params, *, oscillator_period: int = 60,
                    batch_tile: int = 32768):
    """Pallas-backed SwimmerModule.forward, joints-major fast path (zero wrapper copies).

    joint_pos_jm : (n_joints, B) float32 in [-1, 1]   -- joints-major layout
    timesteps    : any shape with B elements (e.g. (1, B), (B,), (B, 1)), >= 0
    params       : (4,) float32  [bneuron_prop, bneuron_osc, muscle_ipsi, muscle_contra]
    returns      : (n_joints, B) float32 joint torques in [-1, 1]
    """
    joint_pos_jm = jnp.asarray(joint_pos_jm, jnp.float32)
    n_joints, batch = joint_pos_jm.shape
    ts = jnp.asarray(timesteps, jnp.float32).reshape(1, batch)
    params = jnp.asarray(params, jnp.float32).reshape(4)

    tb = _pick_batch_tile(batch, batch_tile)
    grid = (pl.cdiv(batch, tb),)

    kernel = functools.partial(swimmer_kernel, period=int(oscillator_period))
    return pl.pallas_call(
        kernel,
        out_shape=jax.ShapeDtypeStruct((n_joints, batch), jnp.float32),
        grid=grid,
        in_specs=[
            pl.BlockSpec((n_joints, tb), lambda i: (0, i)),        # joint positions
            pl.BlockSpec((1, tb), lambda i: (0, i)),               # timesteps
            pl.BlockSpec(memory_space=pltpu.MemorySpace.SMEM),     # shared weights
        ],
        out_specs=pl.BlockSpec((n_joints, tb), lambda i: (0, i)),
        compiler_params=pltpu.CompilerParams(
            dimension_semantics=("parallel",)),
    )(joint_pos_jm, ts, params)


def swimmer_forward(joint_pos, timesteps, params, *, oscillator_period: int = 60,
                    batch_tile: int = 32768):
    """Module-compatible adapter: (B, n_joints) in -> (B, n_joints) out.

    NOTE: this adapter pays two standalone XLA transposes (an extra HBM read+write of
    both the input and the output), which roughly triples end-to-end HBM traffic for
    this memory-bound kernel.  Callers that can keep the data joints-major should call
    `swimmer_torques` directly.
    """
    joint_pos = jnp.asarray(joint_pos, jnp.float32)
    batch, _ = joint_pos.shape
    ts = jnp.asarray(timesteps, jnp.float32).reshape(1, batch)
    out_jm = swimmer_torques(joint_pos.T, ts, params,
                             oscillator_period=oscillator_period, batch_tile=batch_tile)
    return out_jm.T


def swimmer_reference(joint_pos, timesteps, params, *, oscillator_period: int = 60):
    """Pure-JAX port of the PyTorch forward loop (default config), for verification."""
    n_joints = joint_pos.shape[-1]
    w_prop = jnp.maximum(params[0], 0.0)
    w_osc = jnp.maximum(params[1], 0.0)
    w_ipsi = jnp.maximum(params[2], 0.0)
    w_contra = jnp.minimum(params[3], 0.0)
    jpd = jnp.clip(joint_pos, 0.0, 1.0)
    jpv = -jnp.clip(joint_pos, -1.0, 0.0)
    torques = []
    for i in range(n_joints):
        bn_d = jnp.zeros_like(joint_pos[..., 0:1])
        bn_v = jnp.zeros_like(bn_d)
        if i > 0:
            bn_d = bn_d + jpd[..., i - 1 : i] * w_prop
            bn_v = bn_v + jpv[..., i - 1 : i] * w_prop
        if i == 0:
            phase = jnp.round(timesteps) % oscillator_period
            osc_d = jnp.where(phase < oscillator_period // 2, 1.0, 0.0)
            osc_v = 1.0 - osc_d
            bn_d = bn_d + osc_d * w_osc
            bn_v = bn_v + osc_v * w_osc
        bn_d = jnp.clip(bn_d, 0.0, 1.0)
        bn_v = jnp.clip(bn_v, 0.0, 1.0)
        m_d = jnp.clip(bn_d * w_ipsi + bn_v * w_contra, 0.0, 1.0)
        m_v = jnp.clip(bn_v * w_ipsi + bn_d * w_contra, 0.0, 1.0)
        torques.append(m_d - m_v)
    return jnp.concatenate(torques, axis=-1)


if __name__ == "__main__":
    N_JOINTS, PERIOD = 6, 60

    # Shared scalar weights, constant init per the module:
    #   excitatory_constant -> +1.0 (bneuron_prop, bneuron_osc, muscle_ipsi)
    #   inhibitory_constant -> -1.0 (muscle_contra)
    params = jnp.array([1.0, 1.0, 1.0, -1.0], dtype=jnp.float32)

    key = jax.random.PRNGKey(0)
    k1, k2, k3, k4, k5, k6 = jax.random.split(key, 6)

    # 1) Small batch through the module-compatible (B, J) adapter: single full-extent block.
    B = 8
    joint_pos = jax.random.uniform(k1, (B, N_JOINTS), minval=-1.0, maxval=1.0, dtype=jnp.float32)
    timesteps = jax.random.randint(k2, (B, 1), 0, 200).astype(jnp.float32)
    out = jax.block_until_ready(
        swimmer_forward(joint_pos, timesteps, params, oscillator_period=PERIOD))
    ref = swimmer_reference(joint_pos, timesteps, params, oscillator_period=PERIOD)
    assert out.shape == (B, N_JOINTS)
    assert jnp.allclose(out, ref, atol=1e-6), (out, ref)

    # 2) Joints-major fast path (no wrapper transposes): ragged, >=2-step "parallel" grid.
    B2 = 300
    jp2_jm = jax.random.uniform(k3, (N_JOINTS, B2), minval=-1.0, maxval=1.0, dtype=jnp.float32)
    ts2 = jax.random.randint(k4, (1, B2), 0, 10000).astype(jnp.float32)
    out2 = jax.block_until_ready(
        swimmer_torques(jp2_jm, ts2, params, oscillator_period=PERIOD))
    ref2 = swimmer_reference(jp2_jm.T, ts2.reshape(-1, 1), params, oscillator_period=PERIOD)
    assert out2.shape == (N_JOINTS, B2)
    assert jnp.allclose(out2.T, ref2, atol=1e-6), (out2, ref2)

    # 3) Capped tile + ragged last block (multi-step grid).
    B3 = 3000
    jp3_jm = jax.random.uniform(k5, (N_JOINTS, B3), minval=-1.0, maxval=1.0, dtype=jnp.float32)
    ts3 = jax.random.randint(k6, (1, B3), 0, 100000).astype(jnp.float32)
    out3 = jax.block_until_ready(
        swimmer_torques(jp3_jm, ts3, params, oscillator_period=PERIOD, batch_tile=1024))
    ref3 = swimmer_reference(jp3_jm.T, ts3.reshape(-1, 1), params, oscillator_period=PERIOD)
    assert out3.shape == (N_JOINTS, B3)
    assert jnp.allclose(out3.T, ref3, atol=1e-6), (out3, ref3)

    print("KERNEL_OK")
</pallas_src>

<mosaic_0001>
module attributes {stable_mosaic.version = 11 : i64} {
  func.func @swimmer_kernel(%arg0: i32, %arg1: memref<6x8xf32, #tpu.memory_space<vmem>>, %arg2: memref<1x8xf32, #tpu.memory_space<vmem>>, %arg3: memref<4xf32, #tpu.memory_space<smem>>, %arg4: memref<6x8xf32, #tpu.memory_space<vmem>>) attributes {dimension_semantics = [#tpu.dimension_semantics<parallel>], iteration_bounds = array<i64: 1>, scalar_prefetch = 0 : i64, scratch_operands = 0 : i64, tpu.core_type = #tpu.core_type<tc>, window_params = [{transform_indices = @transform_0, window_bounds = array<i64: 6, 8>}, {transform_indices = @transform_1, window_bounds = array<i64: 1, 8>}, {transform_indices = @transform_2, window_bounds = array<i64: 4>}, {transform_indices = @transform_3, window_bounds = array<i64: 6, 8>}]} {
    %c0 = arith.constant 0 : index
    %0 = memref.load %arg3[%c0] : memref<4xf32, #tpu.memory_space<smem>>
    %cst = arith.constant 0.000000e+00 : f32
    %1 = arith.maximumf %0, %cst : f32
    %c1 = arith.constant 1 : index
    %2 = memref.load %arg3[%c1] : memref<4xf32, #tpu.memory_space<smem>>
    %cst_0 = arith.constant 0.000000e+00 : f32
    %3 = arith.maximumf %2, %cst_0 : f32
    %c2 = arith.constant 2 : index
    %4 = memref.load %arg3[%c2] : memref<4xf32, #tpu.memory_space<smem>>
    %cst_1 = arith.constant 0.000000e+00 : f32
    %5 = arith.maximumf %4, %cst_1 : f32
    %c3 = arith.constant 3 : index
    %6 = memref.load %arg3[%c3] : memref<4xf32, #tpu.memory_space<smem>>
    %cst_2 = arith.constant 0.000000e+00 : f32
    %7 = arith.minimumf %6, %cst_2 : f32
    %c0_3 = arith.constant 0 : index
    %c0_4 = arith.constant 0 : index
    %8 = vector.load %arg1[%c0_3, %c0_4] : memref<6x8xf32, #tpu.memory_space<vmem>>, vector<5x8xf32>
    %cst_5 = arith.constant 0.000000e+00 : f32
    %cst_6 = arith.constant 1.000000e+00 : f32
    %9 = vector.broadcast %cst_5 : f32 to vector<5x8xf32>
    %10 = arith.maximumf %9, %8 : vector<5x8xf32>
    %11 = vector.broadcast %cst_6 : f32 to vector<5x8xf32>
    %12 = arith.minimumf %11, %10 : vector<5x8xf32>
    %cst_7 = arith.constant -1.000000e+00 : f32
    %cst_8 = arith.constant 0.000000e+00 : f32
    %13 = vector.broadcast %cst_7 : f32 to vector<5x8xf32>
    %14 = arith.maximumf %13, %8 : vector<5x8xf32>
    %15 = vector.broadcast %cst_8 : f32 to vector<5x8xf32>
    %16 = arith.minimumf %15, %14 : vector<5x8xf32>
    %cst_9 = arith.constant 0.000000e+00 : f32
    %17 = vector.broadcast %cst_9 : f32 to vector<5x8xf32>
    %18 = arith.subf %17, %16 : vector<5x8xf32>
    %19 = vector.broadcast %1 : f32 to vector<5x8xf32>
    %20 = arith.mulf %12, %19 : vector<5x8xf32>
    %cst_10 = arith.constant 0.000000e+00 : f32
    %cst_11 = arith.constant 1.000000e+00 : f32
    %21 = vector.broadcast %cst_10 : f32 to vector<5x8xf32>
    %22 = arith.maximumf %21, %20 : vector<5x8xf32>
    %23 = vector.broadcast %cst_11 : f32 to vector<5x8xf32>
    %24 = arith.minimumf %23, %22 : vector<5x8xf32>
    %25 = vector.broadcast %1 : f32 to vector<5x8xf32>
    %26 = arith.mulf %18, %25 : vector<5x8xf32>
    %cst_12 = arith.constant 0.000000e+00 : f32
    %cst_13 = arith.constant 1.000000e+00 : f32
    %27 = vector.broadcast %cst_12 : f32 to vector<5x8xf32>
    %28 = arith.maximumf %27, %26 : vector<5x8xf32>
    %29 = vector.broadcast %cst_13 : f32 to vector<5x8xf32>
    %30 = arith.minimumf %29, %28 : vector<5x8xf32>
    %31 = vector.broadcast %5 : f32 to vector<5x8xf32>
    %32 = arith.mulf %24, %31 : vector<5x8xf32>
    %33 = vector.broadcast %7 : f32 to vector<5x8xf32>
    %34 = arith.mulf %30, %33 : vector<5x8xf32>
    %35 = arith.addf %32, %34 : vector<5x8xf32>
    %cst_14 = arith.constant 0.000000e+00 : f32
    %cst_15 = arith.constant 1.000000e+00 : f32
    %36 = vector.broadcast %cst_14 : f32 to vector<5x8xf32>
    %37 = arith.maximumf %36, %35 : vector<5x8xf32>
    %38 = vector.broadcast %cst_15 : f32 to vector<5x8xf32>
    %39 = arith.minimumf %38, %37 : vector<5x8xf32>
    %40 = vector.broadcast %5 : f32 to vector<5x8xf32>
    %41 = arith.mulf %30, %40 : vector<5x8xf32>
    %42 = vector.broadcast %7 : f32 to vector<5x8xf32>
    %43 = arith.mulf %24, %42 : vector<5x8xf32>
    %44 = arith.addf %41, %43 : vector<5x8xf32>
    %cst_16 = arith.constant 0.000000e+00 : f32
    %cst_17 = arith.constant 1.000000e+00 : f32
    %45 = vector.broadcast %cst_16 : f32 to vector<5x8xf32>
    %46 = arith.maximumf %45, %44 : vector<5x8xf32>
    %47 = vector.broadcast %cst_17 : f32 to vector<5x8xf32>
    %48 = arith.minimumf %47, %46 : vector<5x8xf32>
    %49 = arith.subf %39, %48 : vector<5x8xf32>
    %c1_18 = arith.constant 1 : index
    %c0_19 = arith.constant 0 : index
    %50 = vector.load %arg4[%c1_18, %c0_19] : memref<6x8xf32, #tpu.memory_space<vmem>>, vector<5x8xf32>
    tpu.vector_store %arg4[%c1_18, %c0_19], %49 {strides = array<i32>} : memref<6x8xf32, #tpu.memory_space<vmem>>, vector<5x8xf32>,
    %c0_20 = arith.constant 0 : index
    %c0_21 = arith.constant 0 : index
    %51 = vector.load %arg2[%c0_20, %c0_21] : memref<1x8xf32, #tpu.memory_space<vmem>>, vector<1x8xf32>
    %52 = math.roundeven %51 : vector<1x8xf32>
    %cst_22 = arith.constant 0.0166666675 : f32
    %53 = vector.broadcast %cst_22 : f32 to vector<1x8xf32>
    %54 = arith.mulf %52, %53 : vector<1x8xf32>
    %55 = math.floor %54 : vector<1x8xf32>
    %cst_23 = arith.constant 6.000000e+01 : f32
    %56 = vector.broadcast %cst_23 : f32 to vector<1x8xf32>
    %57 = arith.mulf %55, %56 : vector<1x8xf32>
    %58 = arith.subf %52, %57 : vector<1x8xf32>
    %cst_24 = arith.constant 0.000000e+00 : f32
    %59 = vector.broadcast %cst_24 : f32 to vector<1x8xf32>
    %60 = arith.cmpf olt, %58, %59 : vector<1x8xf32>
    %cst_25 = arith.constant 6.000000e+01 : f32
    %61 = vector.broadcast %cst_25 : f32 to vector<1x8xf32>
    %62 = arith.addf %58, %61 : vector<1x8xf32>
    %63 = arith.select %60, %62, %58 : vector<1x8xi1>, vector<1x8xf32>
    %cst_26 = arith.constant 6.000000e+01 : f32
    %64 = vector.broadcast %cst_26 : f32 to vector<1x8xf32>
    %65 = arith.cmpf oge, %63, %64 : vector<1x8xf32>
    %cst_27 = arith.constant 6.000000e+01 : f32
    %66 = vector.broadcast %cst_27 : f32 to vector<1x8xf32>
    %67 = arith.subf %63, %66 : vector<1x8xf32>
    %68 = arith.select %65, %67, %63 : vector<1x8xi1>, vector<1x8xf32>
    %cst_28 = arith.constant 3.000000e+01 : f32
    %69 = vector.broadcast %cst_28 : f32 to vector<1x8xf32>
    %70 = arith.cmpf olt, %68, %69 : vector<1x8xf32>
    %cst_29 = arith.constant 1.000000e+00 : f32
    %cst_30 = arith.constant 0.000000e+00 : f32
    %71 = vector.broadcast %cst_29 : f32 to vector<1x8xf32>
    %72 = vector.broadcast %cst_30 : f32 to vector<1x8xf32>
    %73 = arith.select %70, %71, %72 : vector<1x8xi1>, vector<1x8xf32>
    %cst_31 = arith.constant 1.000000e+00 : f32
    %74 = vector.broadcast %cst_31 : f32 to vector<1x8xf32>
    %75 = arith.subf %74, %73 : vector<1x8xf32>
    %76 = vector.broadcast %3 : f32 to vector<1x8xf32>
    %77 = arith.mulf %73, %76 : vector<1x8xf32>
    %cst_32 = arith.constant 0.000000e+00 : f32
    %cst_33 = arith.constant 1.000000e+00 : f32
    %78 = vector.broadcast %cst_32 : f32 to vector<1x8xf32>
    %79 = arith.maximumf %78, %77 : vector<1x8xf32>
    %80 = vector.broadcast %cst_33 : f32 to vector<1x8xf32>
    %81 = arith.minimumf %80, %79 : vector<1x8xf32>
    %82 = vector.broadcast %3 : f32 to vector<1x8xf32>
    %83 = arith.mulf %75, %82 : vector<1x8xf32>
    %cst_34 = arith.constant 0.000000e+00 : f32
    %cst_35 = arith.constant 1.000000e+00 : f32
    %84 = vector.broadcast %cst_34 : f32 to vector<1x8xf32>
    %85 = arith.maximumf %84, %83 : vector<1x8xf32>
    %86 = vector.broadcast %cst_35 : f32 to vector<1x8xf32>
    %87 = arith.minimumf %86, %85 : vector<1x8xf32>
    %88 = vector.broadcast %5 : f32 to vector<1x8xf32>
    %89 = arith.mulf %81, %88 : vector<1x8xf32>
    %90 = vector.broadcast %7 : f32 to vector<1x8xf32>
    %91 = arith.mulf %87, %90 : vector<1x8xf32>
    %92 = arith.addf %89, %91 : vector<1x8xf32>
    %cst_36 = arith.constant 0.000000e+00 : f32
    %cst_37 = arith.constant 1.000000e+00 : f32
    %93 = vector.broadcast %cst_36 : f32 to vector<1x8xf32>
    %94 = arith.maximumf %93, %92 : vector<1x8xf32>
    %95 = vector.broadcast %cst_37 : f32 to vector<1x8xf32>
    %96 = arith.minimumf %95, %94 : vector<1x8xf32>
    %97 = vector.broadcast %5 : f32 to vector<1x8xf32>
    %98 = arith.mulf %87, %97 : vector<1x8xf32>
    %99 = vector.broadcast %7 : f32 to vector<1x8xf32>
    %100 = arith.mulf %81, %99 : vector<1x8xf32>
    %101 = arith.addf %98, %100 : vector<1x8xf32>
    %cst_38 = arith.constant 0.000000e+00 : f32
    %cst_39 = arith.constant 1.000000e+00 : f32
    %102 = vector.broadcast %cst_38 : f32 to vector<1x8xf32>
    %103 = arith.maximumf %102, %101 : vector<1x8xf32>
    %104 = vector.broadcast %cst_39 : f32 to vector<1x8xf32>
    %105 = arith.minimumf %104, %103 : vector<1x8xf32>
    %106 = arith.subf %96, %105 : vector<1x8xf32>
    %c0_40 = arith.constant 0 : index
    %c0_41 = arith.constant 0 : index
    %107 = vector.load %arg4[%c0_40, %c0_41] : memref<6x8xf32, #tpu.memory_space<vmem>>, vector<1x8xf32>
    tpu.vector_store %arg4[%c0_40, %c0_41], %106 {strides = array<i32>} : memref<6x8xf32, #tpu.memory_space<vmem>>, vector<1x8xf32>,
    return
  }
  func.func @transform_0(%arg0: i32) -> (i32, i32) {
    %c0_i32 = arith.constant 0 : i32
    %c0_i32_0 = arith.constant 0 : i32
    return %c0_i32, %arg0 : i32, i32
  }
  func.func @transform_1(%arg0: i32) -> (i32, i32) {
    %c0_i32 = arith.constant 0 : i32
    %c0_i32_0 = arith.constant 0 : i32
    return %c0_i32, %arg0 : i32, i32
  }
  func.func @transform_2(%arg0: i32) -> i32 {
    %c0_i32 = arith.constant 0 : i32
    %c0_i32_0 = arith.constant 0 : i32
    return %c0_i32 : i32
  }
  func.func @transform_3(%arg0: i32) -> (i32, i32) {
    %c0_i32 = arith.constant 0 : i32
    %c0_i32_0 = arith.constant 0 : i32
    return %c0_i32, %arg0 : i32, i32
  }
}

</mosaic_0001>

<llo_original>
// kernel: tpu_custom_call.1
$region0: #{tpu_custom_call.1}
  #allocation0 [shape = 'u32[]', space=smem, size = 0x4, offset = 0x4, fixed_abs, tag = 'smem constant byte address 0x4 - core index']
  #allocation1 [shape = 'u32[144,128]{1,0:T(1,128)}', space=vmem, size = 0x12000, scoped, tag = 'internal scratch']
  %s0 = inlined_call_operand.hbm [shape: f32[6,8], index: 0, kind: input, shape index: {}]
  %s1 = inlined_call_operand.vmem [shape: f32[1,8], index: 1, kind: input, shape index: {}]
  %s2 = inlined_call_operand.vmem [shape: f32[4], index: 2, kind: input, shape index: {}]
  %s3 = inlined_call_operand.hbm [shape: f32[6,8], index: 3, kind: output, shape index: {}]
  %s4 = sld [smem:[#allocation0]]
  $region30: #{tpu_custom_call.1} parent=0
    _
  %s6 = ssub.s32 1, %s4
  %s7 = scalar_select 0, %s6, %s4
  $region1: #{tpu_custom_call.1} parent=0
    #allocation2 [shape = 'u8[4096]{0}', space=vmem, size = 0x1000, scoped, tag = 'input window, operand 0, single buffered']
    #allocation3 [shape = 's32[1]{0}', space=sflag, size = 0x4, scoped, tag = 'scoped memory for tpu_custom_call.1']
    #allocation4 [shape = 's32[1]{0}', space=sflag, size = 0x4, scoped, tag = 'scoped memory for tpu_custom_call.1']
    #allocation5 [shape = 's32[1]{0}', space=sflag, size = 0x4, scoped, tag = 'scoped memory for tpu_custom_call.1']
    #allocation6 [shape = 'u8[512]{0}', space=smem, size = 0x200, scoped, tag = 'input window, operand 2, single buffered']
    #allocation7 [shape = 'u8[4096]{0}', space=vmem, size = 0x1000, scoped, tag = 'output window, operand 0, single buffered']
    %8 = vsyncpa [#allocation3], 0
    %9 = vsyncpa [#allocation5], 0
    %10 = vsyncpa [#allocation4], 0
    // Predicated region
    $region2: #{tpu_custom_call.1} parent=1 // pred_check
      _
    $region3: #{tpu_custom_call.1} parent=1 // pred_check_branch
      %12 = sbr.rel (0) target = $region5
    $region4: #{tpu_custom_call.1} parent=1 // pred_region
      %s14 = ssub.s32 128, 128
      %15 = vsyncadd [#allocation3], %s14
      %s17 = sshll.u32 [#allocation2], 4
      %s18 = int_to_ptr.vmem [resolvable:$true] %s17
      %20 = dma.hbm_to_vmem [thread:$0]  %s0, 128, %s18, [#allocation3]
    $region5: #{tpu_custom_call.1} parent=1 // pred_fallthru
      _
    // Predicated region
    $region6: #{tpu_custom_call.1} parent=1 // pred_check
      _
    $region7: #{tpu_custom_call.1} parent=1 // pred_check_branch
      %22 = sbr.rel (0) target = $region9
    $region8: #{tpu_custom_call.1} parent=1 // pred_region
      _
    $region9: #{tpu_custom_call.1} parent=1 // pred_fallthru
      _
    // Predicated region
    $region10: #{tpu_custom_call.1} parent=1 // pred_check
      _
    $region11: #{tpu_custom_call.1} parent=1 // pred_check_branch
      %24 = sbr.rel (0) target = $region13
    $region12: #{tpu_custom_call.1} parent=1 // pred_region
      %s26 = ssub.s32 16, 16
      %27 = vsyncadd [#allocation5], %s26
      %s29 = sshll.u32 %s2, 4
      %s30 = int_to_ptr.vmem [resolvable:$true] %s29
      %32 = dma.vmem_to_smem %s30, 16, [#allocation6], [#allocation5]
    $region13: #{tpu_custom_call.1} parent=1 // pred_fallthru
      _
    // Predicated region
    $region14: #{tpu_custom_call.1} parent=1 // pred_check
      _
    $region15: #{tpu_custom_call.1} parent=1 // pred_check_branch
      %34 = sbr.rel (0) target = $region17
    $region16: #{tpu_custom_call.1} parent=1 // pred_region
      %35 = dma.done [#allocation3], 128
    $region17: #{tpu_custom_call.1} parent=1 // pred_fallthru
      _
    // Predicated region
    $region18: #{tpu_custom_call.1} parent=1 // pred_check
      _
    $region19: #{tpu_custom_call.1} parent=1 // pred_check_branch
      %37 = sbr.rel (0) target = $region21
    $region20: #{tpu_custom_call.1} parent=1 // pred_region
      %38 = dma.done [#allocation5], 16
    $region21: #{tpu_custom_call.1} parent=1 // pred_fallthru
      _
    %39 = sfence
    %s40 = sld [smem:[#allocation6]]
    %s41 = smax.f32 %s40, 0.0
    %s42 = sld [smem:[#allocation6 + $0x1]]
    %s43 = smax.f32 %s42, 0.0
    %s44 = sld [smem:[#allocation6 + $0x2]]
    %s45 = smax.f32 %s44, 0.0
    %s46 = sld [smem:[#allocation6 + $0x3]]
    %s47 = smin.f32 %s46, 0.0
    %v48 = vld [vmem:[#allocation2] sm:$0x1f]
    %v49 = vmax.f32 %v48, 0.0
    %v50 = vmin.f32 %v49, 1.0
    %v51 = vmax.f32 %v48, -1.0
    %v52 = vmin.f32 %v51, 0.0
    %v53 = vsub.f32 0.0, %v52
    %v54 = vstv %s41
    %v55 = vmul.f32 %v50, %v54
    %v56 = vmax.f32 %v55, 0.0
    %v57 = vmin.f32 %v56, 1.0
    %v58 = vmul.f32 %v53, %v54
    %v59 = vmax.f32 %v58, 0.0
    %v60 = vmin.f32 %v59, 1.0
    %v61 = vstv %s45
    %v62 = vmul.f32 %v57, %v61
    %v63 = vstv %s47
    %v64 = vmul.f32 %v60, %v63
    %v65 = vadd.f32 %v62, %v64
    %v66 = vmax.f32 %v65, 0.0
    %v67 = vmin.f32 %v66, 1.0
    %v68 = vmul.f32 %v60, %v61
    %v69 = vmul.f32 %v57, %v63
    %v70 = vadd.f32 %v68, %v69
    %v71 = vmax.f32 %v70, 0.0
    %v72 = vmin.f32 %v71, 1.0
    %v73 = vsub.f32 %v67, %v72
    %vm74 = vcmask 61440
    %75 = vst.msk [vmem:[#allocation7 + $0x1] sm:$0x1f] %vm74, %v73
    %v76 = vld [vmem:[%s1] sm:$0x1]
    %v77 = vround.ne.pseudo %v76
    %v78 = vmul.f32 %v77, 0.016666668
    %v79 = vfloor.f32 %v78
    %v80 = vmul.f32 %v79, 60.0
    %v81 = vsub.f32 %v77, %v80
    %vm82 = vcmp.lt.f32.partialorder %v81, 0.0
    %v83 = vadd.f32 %v81, 60.0
    %v84 = vsel %vm82, %v83, %v81
    %vm85 = vcmp.ge.f32.partialorder %v84, 60.0
    %v86 = vsub.f32 %v84, 60.0
    %v87 = vsel %vm85, %v86, %v84
    %vm88 = vcmp.lt.f32.partialorder %v87, 30.0
    %v89 = vsel %vm88, 1.0, 0.0
    %v90 = vsub.f32 1.0, %v89
    %v91 = vstv %s43
    %v92 = vmul.f32 %v89, %v91
    %v93 = vmax.f32 %v92, 0.0
    %v94 = vmin.f32 %v93, 1.0
    %v95 = vmul.f32 %v90, %v91
    %v96 = vmax.f32 %v95, 0.0
    %v97 = vmin.f32 %v96, 1.0
    %v98 = vmul.f32 %v94, %v61
    %v99 = vmul.f32 %v97, %v63
    %v100 = vadd.f32 %v98, %v99
    %v101 = vmax.f32 %v100, 0.0
    %v102 = vmin.f32 %v101, 1.0
    %v103 = vmul.f32 %v97, %v61
    %v104 = vmul.f32 %v94, %v63
    %v105 = vadd.f32 %v103, %v104
    %v106 = vmax.f32 %v105, 0.0
    %v107 = vmin.f32 %v106, 1.0
    %v108 = vsub.f32 %v102, %v107
    %vm109 = vcmask 57344
    %110 = vst.msk [vmem:[#allocation7] sm:$0x1] %vm109, %v108
    // Predicated region
    $region22: #{tpu_custom_call.1} parent=1 // pred_check
      _
    $region23: #{tpu_custom_call.1} parent=1 // pred_check_branch
      %112 = sbr.rel (0) target = $region25
    $region24: #{tpu_custom_call.1} parent=1 // pred_region
      %s114 = ssub.s32 128, 128
      %115 = vsyncadd [#allocation4], %s114
      %s117 = sshll.u32 [#allocation7], 4
      %s118 = int_to_ptr.vmem [resolvable:$true] %s117
      %120 = dma.vmem_to_hbm [thread:$0]  %s118, 128, %s3, [#allocation4]
    $region25: #{tpu_custom_call.1} parent=1 // pred_fallthru
      _
    // Predicated region
    $region26: #{tpu_custom_call.1} parent=1 // pred_check
      _
    $region27: #{tpu_custom_call.1} parent=1 // pred_check_branch
      %122 = sbr.rel (0) target = $region29
    $region28: #{tpu_custom_call.1} parent=1 // pred_region
      %123 = dma.done [#allocation4], 128
    $region29: #{tpu_custom_call.1} parent=1 // pred_fallthru
      _
    %124 = vsyncpa [#allocation3], 1
    %125 = vsyncpa [#allocation4], 1
    %126 = vsyncpa [#allocation5], 1

</llo_original>
